<compile_context>
chip_gen: v6e
topology: v6e:2x2x1
jax: 0.10.0
libtpu: 0.0.40
codegen_flags: <defaults>
</compile_context>

<pallas_src>
import math

import jax
import jax.numpy as jnp
from jax.experimental import pallas as pl
from jax.experimental.pallas import tpu as pltpu

KSIZE = 7
PAD = (KSIZE - 1) // 2


# ---------------------------------------------------------------------------
# Host-side helper: turn the (2, 7, 7) conv weight into a (2*HW, HW) matrix M
# so that conv2d(p, w, pad=3) == p.reshape(2*HW) @ M  (per image).
# Row index = ci*HW + ih*W + iw, column index = oh*W + ow.
# ---------------------------------------------------------------------------
def _build_conv_matrix(conv_w, H, W):
    HW = H * W
    oh = jnp.arange(H)
    ow = jnp.arange(W)
    ih = jnp.arange(H)
    iw = jnp.arange(W)
    dy = ih[None, :] - oh[:, None] + PAD            # (H_out, H_in)
    dx = iw[None, :] - ow[:, None] + PAD            # (W_out, W_in)
    vy = (dy >= 0) & (dy < KSIZE)
    vx = (dx >= 0) & (dx < KSIZE)
    dyc = jnp.clip(dy, 0, KSIZE - 1)
    dxc = jnp.clip(dx, 0, KSIZE - 1)
    # taps[c, oh, ih, ow, iw] = conv_w[c, ih-oh+3, iw-ow+3] (0 outside the 7x7 window)
    taps = conv_w[:, dyc[:, :, None, None], dxc[None, None, :, :]]   # (2, Ho, Hi, Wo, Wi)
    valid = vy[:, :, None, None] & vx[None, None, :, :]              # (Ho, Hi, Wo, Wi)
    taps = jnp.where(valid[None], taps, 0.0)
    # -> (c, ih, iw, oh, ow) -> (2*HW, HW)
    return taps.transpose(0, 2, 4, 1, 3).reshape(2 * HW, HW)


# ---------------------------------------------------------------------------
# Blocking plan: per-step batch Bt and explicit VMEM limit.
# ---------------------------------------------------------------------------
def _tensorcores_per_chip():
    try:
        info = pltpu.get_tpu_info()
    except Exception:
        return 1
    for name in ("num_cores", "num_tensorcores", "tensorcores_per_chip", "core_count"):
        v = getattr(info, name, None)
        if isinstance(v, int) and v > 0:
            return v
    return 1


def _vmem_capacity_bytes():
    try:
        v = pltpu.get_tpu_info().vmem_capacity_bytes
        if isinstance(v, int) and v > 0:
            return v
    except Exception:
        pass
    return 64 * 1024 * 1024   # conservative fallback (v7x physical per-TC VMEM)


def _plan_blocking(B, C, HW, x_itemsize, const_bytes):
    """Pick Bt (images per grid step) and an explicit vmem_limit_bytes.

    Per-image accounting: double-buffered input + output tiles (input dtype) plus
    ~2 f32-sized intermediates (x_cg and f32 reduction/upcast working set).
    """
    vmem_cap = _vmem_capacity_bytes()
    total_target = min(vmem_cap // 2, 40 * 1024 * 1024)
    per_image = (4 * x_itemsize + 2 * 4) * C * HW
    avail = max(total_target - const_bytes - (1 << 20), per_image)
    bt_cap = max(1, avail // per_image)

    divisors = [d for d in range(1, B + 1) if B % d == 0]
    fitting = [d for d in divisors if d <= bt_cap] or [1]
    bt = max(fitting)

    # >= 2 grid steps only pays off with >= 2 TensorCores per chip (v7x), and only
    # if each per-step block stays reasonably large (>= ~1 MiB).
    if _tensorcores_per_chip() >= 2:
        multi = [d for d in fitting
                 if B // d >= 2 and d * C * HW * x_itemsize >= (1 << 20)]
        if multi:
            bt = max(multi)

    estimate = per_image * bt + const_bytes + (2 << 20)     # + headroom
    vmem_limit = int(min(max(estimate, 32 * 1024 * 1024), int(0.9 * vmem_cap)))
    return bt, vmem_limit


# ---------------------------------------------------------------------------
# Kernel: one grid step processes Bt images, each as a lane-dense (C, HW) tile.
# ---------------------------------------------------------------------------
def cbam_kernel(x_ref, w1t_ref, b1_ref, w2t_ref, b2_ref, kmat_ref, bnb_ref, o_ref):
    x = x_ref[...]                                   # (Bt, C, HW), input dtype
    Bt, C, HW = x.shape
    inv_hw = 1.0 / float(HW)
    inv_c = 1.0 / float(C)

    # ---------------- ChannelGate ----------------
    avg = jnp.sum(x, axis=2, dtype=jnp.float32) * inv_hw        # (Bt, C) lane reduce, f32 accum
    mx = jnp.max(x, axis=2).astype(jnp.float32)                 # (Bt, C) lane reduce

    # Batched MLP: stack {avg, max} into one (2*Bt, C) LHS -> single pass through
    # both layers instead of two tiny matmul pairs.  bf16 MXU operands, f32 accum.
    pooled = jnp.concatenate([avg, mx], axis=0).astype(jnp.bfloat16)          # (2*Bt, C)
    h = jnp.dot(pooled, w1t_ref[...], preferred_element_type=jnp.float32) + b1_ref[...]
    h = jnp.maximum(h, 0.0).astype(jnp.bfloat16)                              # (2*Bt, Cr)
    att2 = jnp.dot(h, w2t_ref[...], preferred_element_type=jnp.float32) + b2_ref[...]
    att = att2[:Bt] + att2[Bt:]                                               # (Bt, C)
    scale_c = jax.nn.sigmoid(att).astype(x.dtype)[:, :, None]                 # (Bt, C, 1)
    x_cg = x * scale_c                                                        # input dtype

    # ---------------- SpatialGate ----------------
    # ChannelPool: [max over C, mean over C]  (matches torch.cat([max, mean]))
    cmax = jnp.max(x_cg, axis=1).astype(jnp.float32)                          # (Bt, HW)
    cmean = jnp.sum(x_cg, axis=1, dtype=jnp.float32) * inv_c                  # (Bt, HW)

    # 7x7 "same" conv (2->1, no bias) + BN-eval scale as ONE fused MXU matmul with
    # K = 2*HW against the precomputed bf16 Toeplitz-like matrix; BN bias from SMEM.
    # TODO(synk): training-mode BatchNorm (batch statistics) is not implemented;
    #             eval-mode running stats folded into scale/bias are used instead.
    p2 = jnp.concatenate([cmax, cmean], axis=1).astype(jnp.bfloat16)          # (Bt, 2*HW)
    y = jnp.dot(p2, kmat_ref[...], preferred_element_type=jnp.float32) + bnb_ref[0]
    scale_s = jax.nn.sigmoid(y).astype(x.dtype)[:, None, :]                   # (Bt, 1, HW)

    o_ref[...] = (x_cg * scale_s).astype(o_ref.dtype)                         # lane-dense store


# ---------------------------------------------------------------------------
# Wrapper
# ---------------------------------------------------------------------------
def cbam_forward(x, w1, b1, w2, b2, conv_w, bn_scale, bn_bias, *, block_batch=None):
    """x: (B, C, H, W). w1: (Cr, C), b1: (Cr,), w2: (C, Cr), b2: (C,),
    conv_w: (2, 7, 7) [row 0 = max plane, row 1 = mean plane],
    bn_scale/bn_bias: folded eval-mode BatchNorm scalars."""
    B, C, H, W = x.shape
    HW = H * W
    Cr = w1.shape[0]

    x2 = x.reshape(B, C, HW)                        # lane-dense layout (free reshape)

    # MXU operands in bf16 (kernel accumulates in f32); biases stay f32.
    w1t = jnp.asarray(w1, jnp.float32).T.astype(jnp.bfloat16)   # (C, Cr)
    b1r = jnp.asarray(b1, jnp.float32).reshape(1, Cr)
    w2t = jnp.asarray(w2, jnp.float32).T.astype(jnp.bfloat16)   # (Cr, C)
    b2r = jnp.asarray(b2, jnp.float32).reshape(1, C)

    # TODO(synk): for large feature maps (H*W >~ 2048) the dense (2*HW, HW) matrix
    # scales O(HW^2); replace it with a banded per-dy decomposition (pltpu.roll +
    # small (W, W) band matmuls) instead of this dense form.
    if 2 * HW * HW * 2 > 16 * 1024 * 1024:
        raise NotImplementedError("dense conv matrix too large for VMEM; banded path not implemented")
    kmat = _build_conv_matrix(jnp.asarray(conv_w, jnp.float32), H, W)
    kmat = (kmat * jnp.float32(bn_scale)).astype(jnp.bfloat16)  # fold BN scale, bf16 MXU operand
    bnb = jnp.full((1,), bn_bias, jnp.float32)                  # BN bias -> 1-D SMEM scalar

    # Constants are double-buffered by the pipeline (constant index_map avoids re-DMA).
    const_bytes = 2 * (kmat.size * 2 + w1t.size * 2 + w2t.size * 2
                       + b1r.size * 4 + b2r.size * 4)

    Bt, vmem_limit = _plan_blocking(B, C, HW, jnp.dtype(x.dtype).itemsize, const_bytes)
    if block_batch is not None:
        Bt = block_batch
    assert B % Bt == 0
    grid = (B // Bt,)

    grid_spec = pltpu.PrefetchScalarGridSpec(
        num_scalar_prefetch=0,
        grid=grid,
        in_specs=[
            pl.BlockSpec((Bt, C, HW), lambda b: (b, 0, 0)),        # x (lane-dense)
            pl.BlockSpec((C, Cr), lambda b: (0, 0)),               # W1^T (bf16, constant -> no re-DMA)
            pl.BlockSpec((1, Cr), lambda b: (0, 0)),               # b1 (f32)
            pl.BlockSpec((Cr, C), lambda b: (0, 0)),               # W2^T (bf16)
            pl.BlockSpec((1, C), lambda b: (0, 0)),                # b2 (f32)
            pl.BlockSpec((2 * HW, HW), lambda b: (0, 0)),          # conv matrix (bf16, BN folded)
            pl.BlockSpec(memory_space=pltpu.MemorySpace.SMEM),     # BN bias (1,)
        ],
        out_specs=pl.BlockSpec((Bt, C, HW), lambda b: (b, 0, 0)),
    )

    out2 = pl.pallas_call(
        cbam_kernel,
        out_shape=jax.ShapeDtypeStruct((B, C, HW), x.dtype),
        grid_spec=grid_spec,
        compiler_params=pltpu.CompilerParams(
            dimension_semantics=("parallel",),
            vmem_limit_bytes=vmem_limit),
    )(x2, w1t, b1r, w2t, b2r, kmat, bnb)

    return out2.reshape(B, C, H, W)


# ---------------------------------------------------------------------------
# Pure-JAX reference (for a sanity check; full f32)
# ---------------------------------------------------------------------------
def cbam_reference(x, w1, b1, w2, b2, conv_w, bn_scale, bn_bias):
    avg = jnp.mean(x, axis=(2, 3))
    mx = jnp.max(x, axis=(2, 3))

    def mlp(p):
        h = jax.nn.relu(p @ w1.T + b1)
        return h @ w2.T + b2

    att = mlp(avg) + mlp(mx)
    x_cg = x * jax.nn.sigmoid(att)[:, :, None, None]

    cmax = jnp.max(x_cg, axis=1, keepdims=True)
    cmean = jnp.mean(x_cg, axis=1, keepdims=True)
    p = jnp.concatenate([cmax, cmean], axis=1)                      # (B, 2, H, W)
    y = jax.lax.conv_general_dilated(
        p, conv_w[None], window_strides=(1, 1),
        padding=((PAD, PAD), (PAD, PAD)))                           # (B, 1, H, W)
    y = y * bn_scale + bn_bias
    return x_cg * jax.nn.sigmoid(y)


if __name__ == "__main__":
    B, C, H, W = 2, 32, 16, 16
    reduction_ratio = 16
    Cr = C // reduction_ratio

    key = jax.random.PRNGKey(0)
    k_x, k_w1, k_b1, k_w2, k_b2, k_cw = jax.random.split(key, 6)

    x = jax.random.normal(k_x, (B, C, H, W), jnp.float32)

    # Linear(C -> Cr) and Linear(Cr -> C), PyTorch-style uniform init ranges.
    lim1 = 1.0 / math.sqrt(C)
    w1 = jax.random.uniform(k_w1, (Cr, C), jnp.float32, -lim1, lim1)
    b1 = jax.random.uniform(k_b1, (Cr,), jnp.float32, -lim1, lim1)
    lim2 = 1.0 / math.sqrt(Cr)
    w2 = jax.random.uniform(k_w2, (C, Cr), jnp.float32, -lim2, lim2)
    b2 = jax.random.uniform(k_b2, (C,), jnp.float32, -lim2, lim2)

    # Conv2d(2 -> 1, kernel 7x7, bias=False): (in_ch=2, 7, 7); ch0=max, ch1=mean.
    limc = 1.0 / math.sqrt(2 * KSIZE * KSIZE)
    conv_w = jax.random.uniform(k_cw, (2, KSIZE, KSIZE), jnp.float32, -limc, limc)

    # BatchNorm2d(1) eval-mode params at default init:
    # gamma=1, beta=0, running_mean=0, running_var=1, eps=1e-5.
    gamma, beta, rmean, rvar, eps = 1.0, 0.0, 0.0, 1.0, 1e-5
    bn_scale = gamma / math.sqrt(rvar + eps)
    bn_bias = beta - rmean * bn_scale

    out = cbam_forward(x, w1, b1, w2, b2, conv_w, bn_scale, bn_bias)
    out = jax.block_until_ready(out)
    assert out.shape == (B, C, H, W)

    ref = cbam_reference(x, w1, b1, w2, b2, conv_w, bn_scale, bn_bias)
    # Tolerance reflects the intentional bf16 MXU operands (f32 accumulation) vs
    # the full-f32 reference.
    err = float(jnp.max(jnp.abs(out - ref)))
    assert err < 1e-1, f"max abs err {err}"

    print("KERNEL_OK")
</pallas_src>

<mosaic_0001>
module attributes {stable_mosaic.version = 11 : i64} {
  func.func @cbam_kernel(%arg0: i32, %arg1: memref<2x32x256xf32, #tpu.memory_space<vmem>>, %arg2: memref<32x2xbf16, #tpu.memory_space<vmem>>, %arg3: memref<1x2xf32, #tpu.memory_space<vmem>>, %arg4: memref<2x32xbf16, #tpu.memory_space<vmem>>, %arg5: memref<1x32xf32, #tpu.memory_space<vmem>>, %arg6: memref<512x256xbf16, #tpu.memory_space<vmem>>, %arg7: memref<1xf32, #tpu.memory_space<smem>>, %arg8: memref<2x32x256xf32, #tpu.memory_space<vmem>>) attributes {dimension_semantics = [#tpu.dimension_semantics<parallel>], iteration_bounds = array<i64: 1>, scalar_prefetch = 0 : i64, scratch_operands = 0 : i64, tpu.core_type = #tpu.core_type<tc>, window_params = [{transform_indices = @transform_0, window_bounds = array<i64: 2, 32, 256>}, {pipeline_mode = #tpu.pipeline_mode<synchronous>, transform_indices = @transform_1, window_bounds = array<i64: 32, 2>}, {pipeline_mode = #tpu.pipeline_mode<synchronous>, transform_indices = @transform_2, window_bounds = array<i64: 1, 2>}, {pipeline_mode = #tpu.pipeline_mode<synchronous>, transform_indices = @transform_3, window_bounds = array<i64: 2, 32>}, {pipeline_mode = #tpu.pipeline_mode<synchronous>, transform_indices = @transform_4, window_bounds = array<i64: 1, 32>}, {pipeline_mode = #tpu.pipeline_mode<synchronous>, transform_indices = @transform_5, window_bounds = array<i64: 512, 256>}, {transform_indices = @transform_6, window_bounds = array<i64: 1>}, {transform_indices = @transform_7, window_bounds = array<i64: 2, 32, 256>}]} {
    %c0 = arith.constant 0 : index
    %c0_0 = arith.constant 0 : index
    %c0_1 = arith.constant 0 : index
    %0 = vector.load %arg1[%c0, %c0_0, %c0_1] : memref<2x32x256xf32, #tpu.memory_space<vmem>>, vector<2x32x256xf32>
    %cst = arith.constant dense<0.000000e+00> : vector<2x32xf32>
    %1 = vector.multi_reduction <add>, %0, %cst [2] : vector<2x32x256xf32> to vector<2x32xf32>
    %cst_2 = arith.constant 3.906250e-03 : f32
    %2 = vector.broadcast %cst_2 : f32 to vector<2x32xf32>
    %3 = arith.mulf %1, %2 : vector<2x32xf32>
    %cst_3 = arith.constant dense<0xFF800000> : vector<2x32xf32>
    %4 = vector.multi_reduction <maximumf>, %0, %cst_3 [2] : vector<2x32x256xf32> to vector<2x32xf32>
    %5 = tpu.concatenate %3, %4 in 0 : vector<2x32xf32>, vector<2x32xf32> -> vector<4x32xf32>
    %6 = arith.truncf %5 : vector<4x32xf32> to vector<4x32xbf16>
    %c0_4 = arith.constant 0 : index
    %c0_5 = arith.constant 0 : index
    %7 = vector.load %arg2[%c0_4, %c0_5] : memref<32x2xbf16, #tpu.memory_space<vmem>>, vector<32x2xbf16>
    %cst_6 = arith.constant dense<0.000000e+00> : vector<4x2xf32>
    %8 = tpu.matmul %6, %7, %cst_6 {dimension_numbers = #tpu.dot_dimension_numbers<[1], [0], [0], [1], [0, 0, 1, 1], [], []>} : vector<4x32xbf16>, vector<32x2xbf16>, vector<4x2xf32> -> vector<4x2xf32>
    %c0_7 = arith.constant 0 : index
    %c0_8 = arith.constant 0 : index
    %9 = vector.load %arg3[%c0_7, %c0_8] : memref<1x2xf32, #tpu.memory_space<vmem>>, vector<1x2xf32>
    %10 = vector.broadcast %9 : vector<1x2xf32> to vector<4x2xf32>
    %11 = arith.addf %8, %10 : vector<4x2xf32>
    %cst_9 = arith.constant 0.000000e+00 : f32
    %12 = vector.broadcast %cst_9 : f32 to vector<4x2xf32>
    %13 = arith.maximumf %11, %12 : vector<4x2xf32>
    %14 = arith.truncf %13 : vector<4x2xf32> to vector<4x2xbf16>
    %c0_10 = arith.constant 0 : index
    %c0_11 = arith.constant 0 : index
    %15 = vector.load %arg4[%c0_10, %c0_11] : memref<2x32xbf16, #tpu.memory_space<vmem>>, vector<2x32xbf16>
    %cst_12 = arith.constant dense<0.000000e+00> : vector<4x32xf32>
    %16 = tpu.matmul %14, %15, %cst_12 {dimension_numbers = #tpu.dot_dimension_numbers<[1], [0], [0], [1], [0, 0, 1, 1], [], []>} : vector<4x2xbf16>, vector<2x32xbf16>, vector<4x32xf32> -> vector<4x32xf32>
    %c0_13 = arith.constant 0 : index
    %c0_14 = arith.constant 0 : index
    %17 = vector.load %arg5[%c0_13, %c0_14] : memref<1x32xf32, #tpu.memory_space<vmem>>, vector<1x32xf32>
    %18 = vector.broadcast %17 : vector<1x32xf32> to vector<4x32xf32>
    %19 = arith.addf %16, %18 : vector<4x32xf32>
    %20 = vector.extract_strided_slice %19 {offsets = [0, 0], sizes = [2, 32], strides = [1, 1]} : vector<4x32xf32> to vector<2x32xf32>
    %21 = vector.extract_strided_slice %19 {offsets = [2, 0], sizes = [2, 32], strides = [1, 1]} : vector<4x32xf32> to vector<2x32xf32>
    %22 = arith.addf %20, %21 : vector<2x32xf32>
    %23 = arith.negf %22 : vector<2x32xf32>
    %24 = math.exp %23 : vector<2x32xf32>
    %cst_15 = arith.constant 1.000000e+00 : f32
    %25 = vector.broadcast %cst_15 : f32 to vector<2x32xf32>
    %26 = arith.addf %25, %24 : vector<2x32xf32>
    %27 = arith.divf %25, %26 : vector<2x32xf32>
    %28 = vector.shape_cast %27 : vector<2x32xf32> to vector<2x32x1xf32>
    %29 = vector.broadcast %28 : vector<2x32x1xf32> to vector<2x32x256xf32>
    %30 = arith.mulf %0, %29 : vector<2x32x256xf32>
    %cst_16 = arith.constant dense<0xFF800000> : vector<2x256xf32>
    %31 = vector.multi_reduction <maximumf>, %30, %cst_16 [1] : vector<2x32x256xf32> to vector<2x256xf32>
    %cst_17 = arith.constant dense<0.000000e+00> : vector<2x256xf32>
    %32 = vector.multi_reduction <add>, %30, %cst_17 [1] : vector<2x32x256xf32> to vector<2x256xf32>
    %cst_18 = arith.constant 3.125000e-02 : f32
    %33 = vector.broadcast %cst_18 : f32 to vector<2x256xf32>
    %34 = arith.mulf %32, %33 : vector<2x256xf32>
    %35 = tpu.concatenate %31, %34 in 1 : vector<2x256xf32>, vector<2x256xf32> -> vector<2x512xf32>
    %36 = arith.truncf %35 : vector<2x512xf32> to vector<2x512xbf16>
    %c0_19 = arith.constant 0 : index
    %c0_20 = arith.constant 0 : index
    %37 = vector.load %arg6[%c0_19, %c0_20] : memref<512x256xbf16, #tpu.memory_space<vmem>>, vector<512x256xbf16>
    %cst_21 = arith.constant dense<0.000000e+00> : vector<2x256xf32>
    %38 = tpu.matmul %36, %37, %cst_21 {dimension_numbers = #tpu.dot_dimension_numbers<[1], [0], [0], [1], [0, 0, 1, 1], [], []>} : vector<2x512xbf16>, vector<512x256xbf16>, vector<2x256xf32> -> vector<2x256xf32>
    %c0_22 = arith.constant 0 : index
    %39 = memref.load %arg7[%c0_22] : memref<1xf32, #tpu.memory_space<smem>>
    %40 = vector.broadcast %39 : f32 to vector<2x256xf32>
    %41 = arith.addf %38, %40 : vector<2x256xf32>
    %42 = arith.negf %41 : vector<2x256xf32>
    %43 = math.exp %42 : vector<2x256xf32>
    %cst_23 = arith.constant 1.000000e+00 : f32
    %44 = vector.broadcast %cst_23 : f32 to vector<2x256xf32>
    %45 = arith.addf %44, %43 : vector<2x256xf32>
    %46 = arith.divf %44, %45 : vector<2x256xf32>
    %47 = vector.shape_cast %46 : vector<2x256xf32> to vector<2x1x256xf32>
    %48 = vector.broadcast %47 : vector<2x1x256xf32> to vector<2x32x256xf32>
    %49 = arith.mulf %30, %48 : vector<2x32x256xf32>
    %c0_24 = arith.constant 0 : index
    %c0_25 = arith.constant 0 : index
    %c0_26 = arith.constant 0 : index
    %50 = vector.load %arg8[%c0_24, %c0_25, %c0_26] : memref<2x32x256xf32, #tpu.memory_space<vmem>>, vector<2x32x256xf32>
    tpu.vector_store %arg8[%c0_24, %c0_25, %c0_26], %49 {strides = array<i32>} : memref<2x32x256xf32, #tpu.memory_space<vmem>>, vector<2x32x256xf32>,
    return
  }
  func.func @transform_0(%arg0: i32) -> (i32, i32, i32) {
    %c0_i32 = arith.constant 0 : i32
    %c0_i32_0 = arith.constant 0 : i32
    %c0_i32_1 = arith.constant 0 : i32
    return %arg0, %c0_i32, %c0_i32_0 : i32, i32, i32
  }
  func.func @transform_1(%arg0: i32) -> (i32, i32) {
    %c0_i32 = arith.constant 0 : i32
    %c0_i32_0 = arith.constant 0 : i32
    %c0_i32_1 = arith.constant 0 : i32
    return %c0_i32, %c0_i32_0 : i32, i32
  }
  func.func @transform_2(%arg0: i32) -> (i32, i32) {
    %c0_i32 = arith.constant 0 : i32
    %c0_i32_0 = arith.constant 0 : i32
    %c0_i32_1 = arith.constant 0 : i32
    return %c0_i32, %c0_i32_0 : i32, i32
  }
  func.func @transform_3(%arg0: i32) -> (i32, i32) {
    %c0_i32 = arith.constant 0 : i32
    %c0_i32_0 = arith.constant 0 : i32
    %c0_i32_1 = arith.constant 0 : i32
    return %c0_i32, %c0_i32_0 : i32, i32
  }
  func.func @transform_4(%arg0: i32) -> (i32, i32) {
    %c0_i32 = arith.constant 0 : i32
    %c0_i32_0 = arith.constant 0 : i32
    %c0_i32_1 = arith.constant 0 : i32
    return %c0_i32, %c0_i32_0 : i32, i32
  }
  func.func @transform_5(%arg0: i32) -> (i32, i32) {
    %c0_i32 = arith.constant 0 : i32
    %c0_i32_0 = arith.constant 0 : i32
    %c0_i32_1 = arith.constant 0 : i32
    return %c0_i32, %c0_i32_0 : i32, i32
  }
  func.func @transform_6(%arg0: i32) -> i32 {
    %c0_i32 = arith.constant 0 : i32
    %c0_i32_0 = arith.constant 0 : i32
    return %c0_i32 : i32
  }
  func.func @transform_7(%arg0: i32) -> (i32, i32, i32) {
    %c0_i32 = arith.constant 0 : i32
    %c0_i32_0 = arith.constant 0 : i32
    %c0_i32_1 = arith.constant 0 : i32
    return %arg0, %c0_i32, %c0_i32_0 : i32, i32, i32
  }
}

</mosaic_0001>

<llo_original>
// kernel: tpu_custom_call.1
$region0: #{tpu_custom_call.1}
  #allocation0 [shape = 'u32[]', space=smem, size = 0x4, offset = 0x4, fixed_abs, tag = 'smem constant byte address 0x4 - core index']
  #allocation1 [shape = 'u32[144,128]{1,0:T(1,128)}', space=vmem, size = 0x12000, scoped, tag = 'internal scratch']
  #allocation2 [shape = 'f32[1]{0:T(128)S(6)}', space=smem, size = 0x200, scoped, tag = 'scoped memory for tpu_custom_call.1']
  %s0 = inlined_call_operand.hbm [shape: f32[2,32,256], index: 0, kind: input, shape index: {}]
  %s1 = inlined_call_operand.vmem [shape: bf16[32,2], index: 1, kind: input, shape index: {}]
  %s2 = inlined_call_operand.vmem [shape: f32[1,2], index: 2, kind: input, shape index: {}]
  %s3 = inlined_call_operand.vmem [shape: bf16[2,32], index: 3, kind: input, shape index: {}]
  %s4 = inlined_call_operand.vmem [shape: f32[1,32], index: 4, kind: input, shape index: {}]
  %s5 = inlined_call_operand.hbm [shape: bf16[512,256], index: 5, kind: input, shape index: {}]
  %s6 = inlined_call_operand.<no memory space> [shape: f32[1], index: 6, kind: input, shape index: {}]
  %s7 = inlined_call_operand.hbm [shape: f32[2,32,256], index: 7, kind: output, shape index: {}]
  %s8 = sld [smem:[#allocation0]]
  $region46: #{tpu_custom_call.1} parent=0
    _
  %s10 = ssub.s32 1, %s8
  %s11 = scalar_select 0, %s10, %s8
  %12 = sst [smem:[#allocation2]] %s6
  $region1: #{tpu_custom_call.1} parent=0
    #allocation3 [shape = 'u8[65536]{0}', space=vmem, size = 0x10000, scoped, tag = 'input window, operand 0, single buffered']
    #allocation4 [shape = 's32[1]{0}', space=sflag, size = 0x4, scoped, tag = 'scoped memory for tpu_custom_call.1']
    #allocation5 [shape = 's32[1]{0}', space=sflag, size = 0x4, scoped, tag = 'scoped memory for tpu_custom_call.1']
    #allocation6 [shape = 'u8[262144]{0}', space=vmem, size = 0x40000, scoped, tag = 'input window, operand 5, single buffered']
    #allocation7 [shape = 's32[1]{0}', space=sflag, size = 0x4, scoped, tag = 'scoped memory for tpu_custom_call.1']
    #allocation8 [shape = 'u8[65536]{0}', space=vmem, size = 0x10000, scoped, tag = 'output window, operand 0, single buffered']
    %13 = vsyncpa [#allocation4], 0
    %14 = vsyncpa [#allocation7], 0
    %15 = vsyncpa [#allocation5], 0
    // Predicated region
    $region2: #{tpu_custom_call.1} parent=1 // pred_check
      _
    $region3: #{tpu_custom_call.1} parent=1 // pred_check_branch
      %17 = sbr.rel (0) target = $region5
    $region4: #{tpu_custom_call.1} parent=1 // pred_region
      %s19 = ssub.s32 2048, 2048
      %20 = vsyncadd [#allocation4], %s19
      %s21 = sshll.u32 [#allocation3], 4
      %s22 = int_to_ptr.vmem [resolvable:$true] %s21
      %27 = dma.hbm_to_vmem [thread:$0]  %s0, 2048, %s22, [#allocation4], 256, 256, 16
    $region5: #{tpu_custom_call.1} parent=1 // pred_fallthru
      _
    // Predicated region
    $region6: #{tpu_custom_call.1} parent=1 // pred_check
      _
    $region7: #{tpu_custom_call.1} parent=1 // pred_check_branch
      %29 = sbr.rel (0) target = $region9
    $region8: #{tpu_custom_call.1} parent=1 // pred_region
      _
    $region9: #{tpu_custom_call.1} parent=1 // pred_fallthru
      _
    // Predicated region
    $region10: #{tpu_custom_call.1} parent=1 // pred_check
      _
    $region11: #{tpu_custom_call.1} parent=1 // pred_check_branch
      %31 = sbr.rel (0) target = $region13
    $region12: #{tpu_custom_call.1} parent=1 // pred_region
      _
    $region13: #{tpu_custom_call.1} parent=1 // pred_fallthru
      _
    // Predicated region
    $region14: #{tpu_custom_call.1} parent=1 // pred_check
      _
    $region15: #{tpu_custom_call.1} parent=1 // pred_check_branch
      %33 = sbr.rel (0) target = $region17
    $region16: #{tpu_custom_call.1} parent=1 // pred_region
      _
    $region17: #{tpu_custom_call.1} parent=1 // pred_fallthru
      _
    // Predicated region
    $region18: #{tpu_custom_call.1} parent=1 // pred_check
      _
    $region19: #{tpu_custom_call.1} parent=1 // pred_check_branch
      %35 = sbr.rel (0) target = $region21
    $region20: #{tpu_custom_call.1} parent=1 // pred_region
      _
    $region21: #{tpu_custom_call.1} parent=1 // pred_fallthru
      _
    // Predicated region
    $region22: #{tpu_custom_call.1} parent=1 // pred_check
      _
    $region23: #{tpu_custom_call.1} parent=1 // pred_check_branch
      %37 = sbr.rel (0) target = $region25
    $region24: #{tpu_custom_call.1} parent=1 // pred_region
      %s39 = ssub.s32 8192, 8192
      %40 = vsyncadd [#allocation7], %s39
      %s41 = sshll.u32 [#allocation6], 4
      %s42 = int_to_ptr.vmem [resolvable:$true] %s41
      %47 = dma.hbm_to_vmem [thread:$0]  %s5, 8192, %s42, [#allocation7], 128, 128, 8
    $region25: #{tpu_custom_call.1} parent=1 // pred_fallthru
      _
    // Predicated region
    $region26: #{tpu_custom_call.1} parent=1 // pred_check
      _
    $region27: #{tpu_custom_call.1} parent=1 // pred_check_branch
      %49 = sbr.rel (0) target = $region29
    $region28: #{tpu_custom_call.1} parent=1 // pred_region
      _
    $region29: #{tpu_custom_call.1} parent=1 // pred_fallthru
      _
    // Predicated region
    $region30: #{tpu_custom_call.1} parent=1 // pred_check
      _
    $region31: #{tpu_custom_call.1} parent=1 // pred_check_branch
      %51 = sbr.rel (0) target = $region33
    $region32: #{tpu_custom_call.1} parent=1 // pred_region
      %52 = dma.done [#allocation4], 2048
    $region33: #{tpu_custom_call.1} parent=1 // pred_fallthru
      _
    // Predicated region
    $region34: #{tpu_custom_call.1} parent=1 // pred_check
      _
    $region35: #{tpu_custom_call.1} parent=1 // pred_check_branch
      %54 = sbr.rel (0) target = $region37
    $region36: #{tpu_custom_call.1} parent=1 // pred_region
      %55 = dma.done [#allocation7], 8192
    $region37: #{tpu_custom_call.1} parent=1 // pred_fallthru
      _
    %v57 = vld [vmem:[#allocation3] sm:$0xff]
    %v58 = vld [vmem:[#allocation3 + $0x8] sm:$0xff]
    %v59 = vld [vmem:[#allocation3 + $0x10] sm:$0xff]
    %v60 = vld [vmem:[#allocation3 + $0x18] sm:$0xff]
    %v61 = vld [vmem:[#allocation3 + $0x20] sm:$0xff]
    %v62 = vld [vmem:[#allocation3 + $0x28] sm:$0xff]
    %v63 = vld [vmem:[#allocation3 + $0x30] sm:$0xff]
    %v64 = vld [vmem:[#allocation3 + $0x38] sm:$0xff]
    %v65 = vld [vmem:[#allocation3 + $0x40] sm:$0xff]
    %v66 = vld [vmem:[#allocation3 + $0x48] sm:$0xff]
    %v67 = vld [vmem:[#allocation3 + $0x50] sm:$0xff]
    %v68 = vld [vmem:[#allocation3 + $0x58] sm:$0xff]
    %v69 = vld [vmem:[#allocation3 + $0x60] sm:$0xff]
    %v70 = vld [vmem:[#allocation3 + $0x68] sm:$0xff]
    %v71 = vld [vmem:[#allocation3 + $0x70] sm:$0xff]
    %v72 = vld [vmem:[#allocation3 + $0x78] sm:$0xff]
    %v73 = vadd.f32 %v57, %v58
    %74 = vadd.xlane.f32.xlu0 %v73
    %v75 = vpop.xlane.xlu0 %74
    %v76 = vadd.f32 %v59, %v60
    %77 = vadd.xlane.f32.xlu0 %v76
    %v78 = vpop.xlane.xlu0 %77
    %v79 = vadd.f32 %v61, %v62
    %80 = vadd.xlane.f32.xlu0 %v79
    %v81 = vpop.xlane.xlu0 %80
    %v82 = vadd.f32 %v63, %v64
    %83 = vadd.xlane.f32.xlu0 %v82
    %v84 = vpop.xlane.xlu0 %83
    %v85 = vadd.f32 %v65, %v66
    %86 = vadd.xlane.f32.xlu0 %v85
    %v87 = vpop.xlane.xlu0 %86
    %v88 = vadd.f32 %v67, %v68
    %89 = vadd.xlane.f32.xlu0 %v88
    %v90 = vpop.xlane.xlu0 %89
    %v91 = vadd.f32 %v69, %v70
    %92 = vadd.xlane.f32.xlu0 %v91
    %v93 = vpop.xlane.xlu0 %92
    %v94 = vadd.f32 %v71, %v72
    %95 = vadd.xlane.f32.xlu0 %v94
    %v96 = vpop.xlane.xlu0 %95
    %v97 = vmul.f32 %v75, 0.00390625
    %v98 = vmul.f32 %v78, 0.00390625
    %v99 = vmul.f32 %v81, 0.00390625
    %v100 = vmul.f32 %v84, 0.00390625
    %v101 = vmul.f32 %v87, 0.00390625
    %v102 = vmul.f32 %v90, 0.00390625
    %v103 = vmul.f32 %v93, 0.00390625
    %v104 = vmul.f32 %v96, 0.00390625
    %v105 = vmax.f32 %v57, %v58
    %106 = vmax.xlane.f32.xlu0 %v105
    %v107 = vpop.xlane.xlu0 %106
    %v108 = vmax.f32 %v59, %v60
    %109 = vmax.xlane.f32.xlu0 %v108
    %v110 = vpop.xlane.xlu0 %109
    %v111 = vmax.f32 %v61, %v62
    %112 = vmax.xlane.f32.xlu0 %v111
    %v113 = vpop.xlane.xlu0 %112
    %v114 = vmax.f32 %v63, %v64
    %115 = vmax.xlane.f32.xlu0 %v114
    %v116 = vpop.xlane.xlu0 %115
    %v117 = vmax.f32 %v65, %v66
    %118 = vmax.xlane.f32.xlu0 %v117
    %v119 = vpop.xlane.xlu0 %118
    %v120 = vmax.f32 %v67, %v68
    %121 = vmax.xlane.f32.xlu0 %v120
    %v122 = vpop.xlane.xlu0 %121
    %v123 = vmax.f32 %v69, %v70
    %124 = vmax.xlane.f32.xlu0 %v123
    %v125 = vpop.xlane.xlu0 %124
    %v126 = vmax.f32 %v71, %v72
    %127 = vmax.xlane.f32.xlu0 %v126
    %v128 = vpop.xlane.xlu0 %127
    %v137 = vlaneseq
    %v138 = vand.u32 %v137, 127
    %v139 = vlaneseq
    %v140 = vshrl.u32 %v139, 7
    %v141 = vsub.s32 %v138, %v140
    %v142 = vrot.slane %v97, %v141
    %v143 = vadd.s32 %v138, 4294967288
    %v144 = vlaneseq
    %v145 = vshrl.u32 %v144, 7
    %v146 = vsub.s32 %v143, %v145
    %v147 = vrot.slane %v98, %v146
    %vm148 = vcmask 130112
    %v149 = vsel %vm148, %v147, %v142
    %v150 = vadd.s32 %v138, 4294967280
    %v151 = vlaneseq
    %v152 = vshrl.u32 %v151, 7
    %v153 = vsub.s32 %v150, %v152
    %v154 = vrot.slane %v99, %v153
    %vm155 = vcmask 195712
    %v156 = vsel %vm155, %v154, %v149
    %v157 = vadd.s32 %v138, 4294967272
    %v158 = vlaneseq
    %v159 = vshrl.u32 %v158, 7
    %v160 = vsub.s32 %v157, %v159
    %v161 = vrot.slane %v100, %v160
    %vm162 = vcmask 261312
    %v163 = vsel %vm162, %v161, %v156
    %v164 = vlaneseq
    %v165 = vshrl.u32 %v164, 7
    %v166 = vsub.s32 %v138, %v165
    %v167 = vrot.slane %v101, %v166
    %v168 = vlaneseq
    %v169 = vshrl.u32 %v168, 7
    %v170 = vsub.s32 %v143, %v169
    %v171 = vrot.slane %v102, %v170
    %v172 = vsel %vm148, %v171, %v167
    %v173 = vlaneseq
    %v174 = vshrl.u32 %v173, 7
    %v175 = vsub.s32 %v150, %v174
    %v176 = vrot.slane %v103, %v175
    %v177 = vsel %vm155, %v176, %v172
    %v178 = vlaneseq
    %v179 = vshrl.u32 %v178, 7
    %v180 = vsub.s32 %v157, %v179
    %v181 = vrot.slane %v104, %v180
    %v182 = vsel %vm162, %v181, %v177
    %vm183 = vcmask 1041409
    %v184 = vsel %vm183, %v182, %v163
    %v194 = vlaneseq
    %v195 = vshrl.u32 %v194, 7
    %v196 = vsub.s32 %v138, %v195
    %v197 = vrot.slane %v107, %v196
    %v198 = vlaneseq
    %v199 = vshrl.u32 %v198, 7
    %v200 = vsub.s32 %v143, %v199
    %v201 = vrot.slane %v110, %v200
    %v202 = vsel %vm148, %v201, %v197
    %v203 = vlaneseq
    %v204 = vshrl.u32 %v203, 7
    %v205 = vsub.s32 %v150, %v204
    %v206 = vrot.slane %v113, %v205
    %v207 = vsel %vm155, %v206, %v202
    %v208 = vlaneseq
    %v209 = vshrl.u32 %v208, 7
    %v210 = vsub.s32 %v157, %v209
    %v211 = vrot.slane %v116, %v210
    %v212 = vsel %vm162, %v211, %v207
    %v213 = vlaneseq
    %v214 = vshrl.u32 %v213, 7
    %v215 = vsub.s32 %v138, %v214
    %v216 = vrot.slane %v119, %v215
    %v217 = vlaneseq
    %v218 = vshrl.u32 %v217, 7
    %v219 = vsub.s32 %v143, %v218
    %v220 = vrot.slane %v122, %v219
    %v221 = vsel %vm148, %v220, %v216
    %v222 = vlaneseq
    %v223 = vshrl.u32 %v222, 7
    %v224 = vsub.s32 %v150, %v223
    %v225 = vrot.slane %v125, %v224
    %v226 = vsel %vm155, %v225, %v221
    %v227 = vlaneseq
    %v228 = vshrl.u32 %v227, 7
    %v229 = vsub.s32 %v157, %v228
    %v230 = vrot.slane %v128, %v229
    %v231 = vsel %vm162, %v230, %v226
    %vm232 = vcmask 1043459
    %v233 = vsel %vm232, %v231, %v212
    %vm235 = vcmask 1041408
    %v236 = vsel %vm235, %v184, %v233
    %v237 = vpack.c.bf16 %v236, %v236
    %v238 = vld [vmem:[%s1] sm:$0xf]
    %v239 = vld [vmem:[%s1 + $0x4] sm:$0xf]
    %v240 = vld [vmem:[%s1 + $0x8] sm:$0xf]
    %v241 = vld [vmem:[%s1 + $0xc] sm:$0xf]
    %v242 = vld [vmem:[%s2] sm:$0x1]
    %v244 = vlaneseq
    %v245 = vshrl.u32 %v244, 7
    %v246 = vsub.s32 0, %v245
    %v247 = vrot.slane %v242, %v246
    %v253 = vunpack.c.l.b16 %v238
    %v254 = vunpack.c.l.b16 %v239
    %v255 = vunpack.c.l.b16 %v240
    %v256 = vunpack.c.l.b16 %v241
    %v257 = vpack.c.b16 %v254, %v253
    %v258 = vpack.c.b16 %v256, %v255
    %vm261 = vcmask 261120
    %v263 = vsel %vm261, %v237, 0
    %265 = vmatprep.subr.bf16.mxu0 0
    %266 = vmatpush1.bf16.msra.mxu0 0
    %267 = vmatprep.subr.bf16.mxu0 0
    %268 = vmatpush1.bf16.msra.mxu0 0
    %269 = vmatprep.subr.bf16.mxu0 0
    %270 = vmatpush1.bf16.msra.mxu0 0
    %271 = vmatprep.subr.bf16.mxu0 0
    %272 = vmatpush1.bf16.msra.mxu0 0
    %273 = vmatprep.subr.bf16.mxu0 0
    %274 = vmatpush1.bf16.msra.mxu0 0
    %275 = vmatprep.subr.bf16.mxu0 0
    %276 = vmatpush1.bf16.msra.mxu0 0
    %277 = vmatprep.subr.bf16.mxu0 0
    %278 = vmatpush1.bf16.msra.mxu0 %v258
    %279 = vmatprep.subr.bf16.mxu0 0
    %280 = vmatpush1.bf16.msra.mxu0 %v257
    %281 = vmatprep.subr.bf16.mxu0 0
    %282 = vmatpush2.bf16.msra.mxu0 0
    %283 = vmatprep.subr.bf16.mxu0 0
    %284 = vmatpush2.bf16.msra.mxu0 0
    %285 = vmatprep.subr.bf16.mxu0 0
    %286 = vmatpush2.bf16.msra.mxu0 0
    %287 = vmatprep.subr.bf16.mxu0 0
    %288 = vmatpush2.bf16.msra.mxu0 0
    %289 = vmatprep.subr.bf16.mxu0 0
    %290 = vmatpush2.bf16.msra.mxu0 0
    %291 = vmatprep.subr.bf16.mxu0 0
    %292 = vmatpush2.bf16.msra.mxu0 0
    %293 = vmatprep.subr.bf16.mxu0 0
    %294 = vmatpush2.bf16.msra.mxu0 0
    %295 = vmatprep.subr.bf16.mxu0 0
    %296 = vmatpush2.bf16.msra.mxu0 0
    %297 = vmatprep.mubr.bf16.mxu0 0
    %298 = vmatmul.mubr.bf16.gmra.mxu0 %v263
    %v299 = vpop.f32.mrf.mxu0
    %v300 = vadd.f32 %v247, %v299
    %v301 = vpop.f32.mrf.mxu0
    %v302 = vpop.f32.mrf.mxu0
    %v303 = vpop.f32.mrf.mxu0
    %304 = vdwg.mxu0
    %v305 = vmax.f32 %v300, 0.0
    %v306 = vpack.c.bf16 %v305, %v305
    %v307 = vld [vmem:[%s3] sm:$0x1]
    %v308 = vld [vmem:[%s4] sm:$0x1]
    %v310 = vlaneseq
    %v311 = vshrl.u32 %v310, 7
    %v312 = vsub.s32 0, %v311
    %v313 = vrot.slane %v308, %v312
    %vm315 = vcmask 15360
    %v317 = vsel %vm315, %v306, 0
    %vm319 = vcmask 1040384
    %v321 = vsel %vm319, %v307, 0
    %323 = vmatprep.subr.bf16.mxu0 0
    %324 = vmatpush1.bf16.msra.mxu0 0
    %325 = vmatprep.subr.bf16.mxu0 0
    %326 = vmatpush1.bf16.msra.mxu0 0
    %327 = vmatprep.subr.bf16.mxu0 0
    %328 = vmatpush1.bf16.msra.mxu0 0
    %329 = vmatprep.subr.bf16.mxu0 0
    %330 = vmatpush1.bf16.msra.mxu0 0
    %331 = vmatprep.subr.bf16.mxu0 0
    %332 = vmatpush1.bf16.msra.mxu0 0
    %333 = vmatprep.subr.bf16.mxu0 0
    %334 = vmatpush1.bf16.msra.mxu0 0
    %335 = vmatprep.subr.bf16.mxu0 0
    %336 = vmatpush1.bf16.msra.mxu0 0
    %337 = vmatprep.subr.bf16.mxu0 0
    %338 = vmatpush1.bf16.msra.mxu0 %v321
    %339 = vmatprep.subr.bf16.mxu0 0
    %340 = vmatpush2.bf16.msra.mxu0 0
    %341 = vmatprep.subr.bf16.mxu0 0
    %342 = vmatpush2.bf16.msra.mxu0 0
    %343 = vmatprep.subr.bf16.mxu0 0
    %344 = vmatpush2.bf16.msra.mxu0 0
    %345 = vmatprep.subr.bf16.mxu0 0
    %346 = vmatpush2.bf16.msra.mxu0 0
    %347 = vmatprep.subr.bf16.mxu0 0
    %348 = vmatpush2.bf16.msra.mxu0 0
    %349 = vmatprep.subr.bf16.mxu0 0
    %350 = vmatpush2.bf16.msra.mxu0 0
    %351 = vmatprep.subr.bf16.mxu0 0
    %352 = vmatpush2.bf16.msra.mxu0 0
    %353 = vmatprep.subr.bf16.mxu0 0
    %354 = vmatpush2.bf16.msra.mxu0 0
    %355 = vmatprep.mubr.bf16.mxu0 0
    %356 = vmatmul.mubr.bf16.gmra.mxu0 %v317
    %v357 = vpop.f32.mrf.mxu0
    %v358 = vadd.f32 %v313, %v357
    %v359 = vpop.f32.mrf.mxu0
    %v360 = vpop.f32.mrf.mxu0
    %v361 = vpop.f32.mrf.mxu0
    %362 = vdwg.mxu0
    %v364 = vrot.slane %v358, 2
    %v366 = vadd.f32 %v358, %v364
    %v367 = vxor.u32 %v366, 2147483648
    %v368 = vmul.f32 %v367, 1.442695
    %v369 = vpow.pop %v368
    %v370 = vadd.f32 %v369, 1.0
    %v371 = vrcp.pop %v370
    %v372 = vmul.f32 1.0, %v371
    %v373 = vlaneseq
    %v374 = vshrl.u32 %v373, 7
    %v375 = vsub.s32 0, %v374
    %v376 = vrot.slane %v372, %v375
    %378 = vbcast.lane.b32.xlu0 %v376, 256
    %v379 = vpop.permute.xlu0 %378
    %s381 = sor.u32 256, 8
    %382 = vbcast.lane.b32.xlu0 %v376, %s381
    %v383 = vpop.permute.xlu0 %382
    %s385 = sor.u32 256, 16
    %386 = vbcast.lane.b32.xlu0 %v376, %s385
    %v387 = vpop.permute.xlu0 %386
    %s389 = sor.u32 256, 24
    %390 = vbcast.lane.b32.xlu0 %v376, %s389
    %v391 = vpop.permute.xlu0 %390
    %v392 = vlaneseq
    %v393 = vshrl.u32 %v392, 7
    %v394 = vsub.s32 1, %v393
    %v395 = vrot.slane %v372, %v394
    %397 = vbcast.lane.b32.xlu0 %v395, 256
    %v398 = vpop.permute.xlu0 %397
    %s400 = sor.u32 256, 8
    %401 = vbcast.lane.b32.xlu0 %v395, %s400
    %v402 = vpop.permute.xlu0 %401
    %s404 = sor.u32 256, 16
    %405 = vbcast.lane.b32.xlu0 %v395, %s404
    %v406 = vpop.permute.xlu0 %405
    %s408 = sor.u32 256, 24
    %409 = vbcast.lane.b32.xlu0 %v395, %s408
    %v410 = vpop.permute.xlu0 %409
    %v411 = vmul.f32 %v57, %v379
    %v412 = vmul.f32 %v58, %v379
    %v413 = vmul.f32 %v59, %v383
    %v414 = vmul.f32 %v60, %v383
    %v415 = vmul.f32 %v61, %v387
    %v416 = vmul.f32 %v62, %v387
    %v417 = vmul.f32 %v63, %v391
    %v418 = vmul.f32 %v64, %v391
    %v419 = vmul.f32 %v65, %v398
    %v420 = vmul.f32 %v66, %v398
    %v421 = vmul.f32 %v67, %v402
    %v422 = vmul.f32 %v68, %v402
    %v423 = vmul.f32 %v69, %v406
    %v424 = vmul.f32 %v70, %v406
    %v425 = vmul.f32 %v71, %v410
    %v426 = vmul.f32 %v72, %v410
    %v427 = vmax.f32 %v411, %v413
    %v428 = vmax.f32 %v427, %v415
    %v429 = vmax.f32 %v428, %v417
    %v430 = vrot.slane %v429, 4
    %v431 = vmax.f32 %v429, %v430
    %v432 = vrot.slane %v431, 2
    %v433 = vmax.f32 %v431, %v432
    %v434 = vrot.slane %v433, 1
    %v435 = vmax.f32 %v433, %v434
    %v436 = vmax.f32 %v412, %v414
    %v437 = vmax.f32 %v436, %v416
    %v438 = vmax.f32 %v437, %v418
    %v439 = vrot.slane %v438, 4
    %v440 = vmax.f32 %v438, %v439
    %v441 = vrot.slane %v440, 2
    %v442 = vmax.f32 %v440, %v441
    %v443 = vrot.slane %v442, 1
    %v444 = vmax.f32 %v442, %v443
    %v445 = vmax.f32 %v419, %v421
    %v446 = vmax.f32 %v445, %v423
    %v447 = vmax.f32 %v446, %v425
    %v448 = vrot.slane %v447, 4
    %v449 = vmax.f32 %v447, %v448
    %v450 = vrot.slane %v449, 2
    %v451 = vmax.f32 %v449, %v450
    %v452 = vrot.slane %v451, 1
    %v453 = vmax.f32 %v451, %v452
    %v454 = vmax.f32 %v420, %v422
    %v455 = vmax.f32 %v454, %v424
    %v456 = vmax.f32 %v455, %v426
    %v457 = vrot.slane %v456, 4
    %v458 = vmax.f32 %v456, %v457
    %v459 = vrot.slane %v458, 2
    %v460 = vmax.f32 %v458, %v459
    %v461 = vrot.slane %v460, 1
    %v462 = vmax.f32 %v460, %v461
    %v463 = vadd.f32 %v411, %v413
    %v464 = vadd.f32 %v463, %v415
    %v465 = vadd.f32 %v464, %v417
    %v466 = vrot.slane %v465, 4
    %v467 = vadd.f32 %v465, %v466
    %v468 = vrot.slane %v467, 2
    %v469 = vadd.f32 %v467, %v468
    %v470 = vrot.slane %v469, 1
    %v471 = vadd.f32 %v469, %v470
    %v472 = vadd.f32 %v412, %v414
    %v473 = vadd.f32 %v472, %v416
    %v474 = vadd.f32 %v473, %v418
    %v475 = vrot.slane %v474, 4
    %v476 = vadd.f32 %v474, %v475
    %v477 = vrot.slane %v476, 2
    %v478 = vadd.f32 %v476, %v477
    %v479 = vrot.slane %v478, 1
    %v480 = vadd.f32 %v478, %v479
    %v481 = vadd.f32 %v419, %v421
    %v482 = vadd.f32 %v481, %v423
    %v483 = vadd.f32 %v482, %v425
    %v484 = vrot.slane %v483, 4
    %v485 = vadd.f32 %v483, %v484
    %v486 = vrot.slane %v485, 2
    %v487 = vadd.f32 %v485, %v486
    %v488 = vrot.slane %v487, 1
    %v489 = vadd.f32 %v487, %v488
    %v490 = vadd.f32 %v420, %v422
    %v491 = vadd.f32 %v490, %v424
    %v492 = vadd.f32 %v491, %v426
    %v493 = vrot.slane %v492, 4
    %v494 = vadd.f32 %v492, %v493
    %v495 = vrot.slane %v494, 2
    %v496 = vadd.f32 %v494, %v495
    %v497 = vrot.slane %v496, 1
    %v498 = vadd.f32 %v496, %v497
    %v499 = vmul.f32 %v471, 0.03125
    %v500 = vmul.f32 %v480, 0.03125
    %v501 = vmul.f32 %v489, 0.03125
    %v502 = vmul.f32 %v498, 0.03125
    %v507 = vsel %vm183, %v453, %v435
    %v508 = vsel %vm183, %v462, %v444
    %v515 = vsel %vm183, %v501, %v499
    %v516 = vsel %vm183, %v502, %v500
    %v519 = vpack.c.bf16 %v507, %v507
    %v520 = vpack.c.bf16 %v508, %v508
    %v521 = vpack.c.bf16 %v515, %v515
    %v522 = vpack.c.bf16 %v516, %v516
    %v523 = vld [vmem:[#allocation6] sm:$0xff]
    %v524 = vld [vmem:[#allocation6 + $0x8] sm:$0xff]
    %v525 = vld [vmem:[#allocation6 + $0x10] sm:$0xff]
    %v526 = vld [vmem:[#allocation6 + $0x18] sm:$0xff]
    %v527 = vld [vmem:[#allocation6 + $0x20] sm:$0xff]
    %v528 = vld [vmem:[#allocation6 + $0x28] sm:$0xff]
    %v529 = vld [vmem:[#allocation6 + $0x30] sm:$0xff]
    %v530 = vld [vmem:[#allocation6 + $0x38] sm:$0xff]
    %v531 = vld [vmem:[#allocation6 + $0x40] sm:$0xff]
    %v532 = vld [vmem:[#allocation6 + $0x48] sm:$0xff]
    %v533 = vld [vmem:[#allocation6 + $0x50] sm:$0xff]
    %v534 = vld [vmem:[#allocation6 + $0x58] sm:$0xff]
    %v535 = vld [vmem:[#allocation6 + $0x60] sm:$0xff]
    %v536 = vld [vmem:[#allocation6 + $0x68] sm:$0xff]
    %v537 = vld [vmem:[#allocation6 + $0x70] sm:$0xff]
    %v538 = vld [vmem:[#allocation6 + $0x78] sm:$0xff]
    %v539 = vld [vmem:[#allocation6 + $0x80] sm:$0xff]
    %v540 = vld [vmem:[#allocation6 + $0x88] sm:$0xff]
    %v541 = vld [vmem:[#allocation6 + $0x90] sm:$0xff]
    %v542 = vld [vmem:[#allocation6 + $0x98] sm:$0xff]
    %v543 = vld [vmem:[#allocation6 + $0xa0] sm:$0xff]
    %v544 = vld [vmem:[#allocation6 + $0xa8] sm:$0xff]
    %v545 = vld [vmem:[#allocation6 + $0xb0] sm:$0xff]
    %v546 = vld [vmem:[#allocation6 + $0xb8] sm:$0xff]
    %v547 = vld [vmem:[#allocation6 + $0xc0] sm:$0xff]
    %v548 = vld [vmem:[#allocation6 + $0xc8] sm:$0xff]
    %v549 = vld [vmem:[#allocation6 + $0xd0] sm:$0xff]
    %v550 = vld [vmem:[#allocation6 + $0xd8] sm:$0xff]
    %v551 = vld [vmem:[#allocation6 + $0xe0] sm:$0xff]
    %v552 = vld [vmem:[#allocation6 + $0xe8] sm:$0xff]
    %v553 = vld [vmem:[#allocation6 + $0xf0] sm:$0xff]
    %v554 = vld [vmem:[#allocation6 + $0xf8] sm:$0xff]
    %v555 = vld [vmem:[#allocation6 + $0x100] sm:$0xff]
    %v556 = vld [vmem:[#allocation6 + $0x108] sm:$0xff]
    %v557 = vld [vmem:[#allocation6 + $0x110] sm:$0xff]
    %v558 = vld [vmem:[#allocation6 + $0x118] sm:$0xff]
    %v559 = vld [vmem:[#allocation6 + $0x120] sm:$0xff]
    %v560 = vld [vmem:[#allocation6 + $0x128] sm:$0xff]
    %v561 = vld [vmem:[#allocation6 + $0x130] sm:$0xff]
    %v562 = vld [vmem:[#allocation6 + $0x138] sm:$0xff]
    %v563 = vld [vmem:[#allocation6 + $0x140] sm:$0xff]
    %v564 = vld [vmem:[#allocation6 + $0x148] sm:$0xff]
    %v565 = vld [vmem:[#allocation6 + $0x150] sm:$0xff]
    %v566 = vld [vmem:[#allocation6 + $0x158] sm:$0xff]
    %v567 = vld [vmem:[#allocation6 + $0x160] sm:$0xff]
    %v568 = vld [vmem:[#allocation6 + $0x168] sm:$0xff]
    %v569 = vld [vmem:[#allocation6 + $0x170] sm:$0xff]
    %v570 = vld [vmem:[#allocation6 + $0x178] sm:$0xff]
    %v571 = vld [vmem:[#allocation6 + $0x180] sm:$0xff]
    %v572 = vld [vmem:[#allocation6 + $0x188] sm:$0xff]
    %v573 = vld [vmem:[#allocation6 + $0x190] sm:$0xff]
    %v574 = vld [vmem:[#allocation6 + $0x198] sm:$0xff]
    %v575 = vld [vmem:[#allocation6 + $0x1a0] sm:$0xff]
    %v576 = vld [vmem:[#allocation6 + $0x1a8] sm:$0xff]
    %v577 = vld [vmem:[#allocation6 + $0x1b0] sm:$0xff]
    %v578 = vld [vmem:[#allocation6 + $0x1b8] sm:$0xff]
    %v579 = vld [vmem:[#allocation6 + $0x1c0] sm:$0xff]
    %v580 = vld [vmem:[#allocation6 + $0x1c8] sm:$0xff]
    %v581 = vld [vmem:[#allocation6 + $0x1d0] sm:$0xff]
    %v582 = vld [vmem:[#allocation6 + $0x1d8] sm:$0xff]
    %v583 = vld [vmem:[#allocation6 + $0x1e0] sm:$0xff]
    %v584 = vld [vmem:[#allocation6 + $0x1e8] sm:$0xff]
    %v585 = vld [vmem:[#allocation6 + $0x1f0] sm:$0xff]
    %v586 = vld [vmem:[#allocation6 + $0x1f8] sm:$0xff]
    %s587 = sld [smem:[#allocation2]]
    %v588 = vstv %s587
    %v653 = vunpack.c.l.b16 %v523
    %v654 = vunpack.c.h.b16 %v523
    %v655 = vunpack.c.l.b16 %v524
    %v656 = vunpack.c.h.b16 %v524
    %v657 = vunpack.c.l.b16 %v525
    %v658 = vunpack.c.h.b16 %v525
    %v659 = vunpack.c.l.b16 %v526
    %v660 = vunpack.c.h.b16 %v526
    %v661 = vunpack.c.l.b16 %v527
    %v662 = vunpack.c.h.b16 %v527
    %v663 = vunpack.c.l.b16 %v528
    %v664 = vunpack.c.h.b16 %v528
    %v665 = vunpack.c.l.b16 %v529
    %v666 = vunpack.c.h.b16 %v529
    %v667 = vunpack.c.l.b16 %v530
    %v668 = vunpack.c.h.b16 %v530
    %v669 = vunpack.c.l.b16 %v531
    %v670 = vunpack.c.h.b16 %v531
    %v671 = vunpack.c.l.b16 %v532
    %v672 = vunpack.c.h.b16 %v532
    %v673 = vunpack.c.l.b16 %v533
    %v674 = vunpack.c.h.b16 %v533
    %v675 = vunpack.c.l.b16 %v534
    %v676 = vunpack.c.h.b16 %v534
    %v677 = vunpack.c.l.b16 %v535
    %v678 = vunpack.c.h.b16 %v535
    %v679 = vunpack.c.l.b16 %v536
    %v680 = vunpack.c.h.b16 %v536
    %v681 = vunpack.c.l.b16 %v537
    %v682 = vunpack.c.h.b16 %v537
    %v683 = vunpack.c.l.b16 %v538
    %v684 = vunpack.c.h.b16 %v538
    %v685 = vunpack.c.l.b16 %v539
    %v686 = vunpack.c.h.b16 %v539
    %v687 = vunpack.c.l.b16 %v540
    %v688 = vunpack.c.h.b16 %v540
    %v689 = vunpack.c.l.b16 %v541
    %v690 = vunpack.c.h.b16 %v541
    %v691 = vunpack.c.l.b16 %v542
    %v692 = vunpack.c.h.b16 %v542
    %v693 = vunpack.c.l.b16 %v543
    %v694 = vunpack.c.h.b16 %v543
    %v695 = vunpack.c.l.b16 %v544
    %v696 = vunpack.c.h.b16 %v544
    %v697 = vunpack.c.l.b16 %v545
    %v698 = vunpack.c.h.b16 %v545
    %v699 = vunpack.c.l.b16 %v546
    %v700 = vunpack.c.h.b16 %v546
    %v701 = vunpack.c.l.b16 %v547
    %v702 = vunpack.c.h.b16 %v547
    %v703 = vunpack.c.l.b16 %v548
    %v704 = vunpack.c.h.b16 %v548
    %v705 = vunpack.c.l.b16 %v549
    %v706 = vunpack.c.h.b16 %v549
    %v707 = vunpack.c.l.b16 %v550
    %v708 = vunpack.c.h.b16 %v550
    %v709 = vunpack.c.l.b16 %v551
    %v710 = vunpack.c.h.b16 %v551
    %v711 = vunpack.c.l.b16 %v552
    %v712 = vunpack.c.h.b16 %v552
    %v713 = vunpack.c.l.b16 %v553
    %v714 = vunpack.c.h.b16 %v553
    %v715 = vunpack.c.l.b16 %v554
    %v716 = vunpack.c.h.b16 %v554
    %v717 = vunpack.c.l.b16 %v555
    %v718 = vunpack.c.h.b16 %v555
    %v719 = vunpack.c.l.b16 %v556
    %v720 = vunpack.c.h.b16 %v556
    %v721 = vunpack.c.l.b16 %v557
    %v722 = vunpack.c.h.b16 %v557
    %v723 = vunpack.c.l.b16 %v558
    %v724 = vunpack.c.h.b16 %v558
    %v725 = vunpack.c.l.b16 %v559
    %v726 = vunpack.c.h.b16 %v559
    %v727 = vunpack.c.l.b16 %v560
    %v728 = vunpack.c.h.b16 %v560
    %v729 = vunpack.c.l.b16 %v561
    %v730 = vunpack.c.h.b16 %v561
    %v731 = vunpack.c.l.b16 %v562
    %v732 = vunpack.c.h.b16 %v562
    %v733 = vunpack.c.l.b16 %v563
    %v734 = vunpack.c.h.b16 %v563
    %v735 = vunpack.c.l.b16 %v564
    %v736 = vunpack.c.h.b16 %v564
    %v737 = vunpack.c.l.b16 %v565
    %v738 = vunpack.c.h.b16 %v565
    %v739 = vunpack.c.l.b16 %v566
    %v740 = vunpack.c.h.b16 %v566
    %v741 = vunpack.c.l.b16 %v567
    %v742 = vunpack.c.h.b16 %v567
    %v743 = vunpack.c.l.b16 %v568
    %v744 = vunpack.c.h.b16 %v568
    %v745 = vunpack.c.l.b16 %v569
    %v746 = vunpack.c.h.b16 %v569
    %v747 = vunpack.c.l.b16 %v570
    %v748 = vunpack.c.h.b16 %v570
    %v749 = vunpack.c.l.b16 %v571
    %v750 = vunpack.c.h.b16 %v571
    %v751 = vunpack.c.l.b16 %v572
    %v752 = vunpack.c.h.b16 %v572
    %v753 = vunpack.c.l.b16 %v573
    %v754 = vunpack.c.h.b16 %v573
    %v755 = vunpack.c.l.b16 %v574
    %v756 = vunpack.c.h.b16 %v574
    %v757 = vunpack.c.l.b16 %v575
    %v758 = vunpack.c.h.b16 %v575
    %v759 = vunpack.c.l.b16 %v576
    %v760 = vunpack.c.h.b16 %v576
    %v761 = vunpack.c.l.b16 %v577
    %v762 = vunpack.c.h.b16 %v577
    %v763 = vunpack.c.l.b16 %v578
    %v764 = vunpack.c.h.b16 %v578
    %v765 = vunpack.c.l.b16 %v579
    %v766 = vunpack.c.h.b16 %v579
    %v767 = vunpack.c.l.b16 %v580
    %v768 = vunpack.c.h.b16 %v580
    %v769 = vunpack.c.l.b16 %v581
    %v770 = vunpack.c.h.b16 %v581
    %v771 = vunpack.c.l.b16 %v582
    %v772 = vunpack.c.h.b16 %v582
    %v773 = vunpack.c.l.b16 %v583
    %v774 = vunpack.c.h.b16 %v583
    %v775 = vunpack.c.l.b16 %v584
    %v776 = vunpack.c.h.b16 %v584
    %v777 = vunpack.c.l.b16 %v585
    %v778 = vunpack.c.h.b16 %v585
    %v779 = vunpack.c.l.b16 %v586
    %v780 = vunpack.c.h.b16 %v586
    %v781 = vpack.c.b16 %v655, %v653
    %v782 = vpack.c.b16 %v656, %v654
    %v783 = vpack.c.b16 %v659, %v657
    %v784 = vpack.c.b16 %v660, %v658
    %v785 = vpack.c.b16 %v663, %v661
    %v786 = vpack.c.b16 %v664, %v662
    %v787 = vpack.c.b16 %v667, %v665
    %v788 = vpack.c.b16 %v668, %v666
    %v789 = vpack.c.b16 %v671, %v669
    %v790 = vpack.c.b16 %v672, %v670
    %v791 = vpack.c.b16 %v675, %v673
    %v792 = vpack.c.b16 %v676, %v674
    %v793 = vpack.c.b16 %v679, %v677
    %v794 = vpack.c.b16 %v680, %v678
    %v795 = vpack.c.b16 %v683, %v681
    %v796 = vpack.c.b16 %v684, %v682
    %v797 = vpack.c.b16 %v687, %v685
    %v798 = vpack.c.b16 %v688, %v686
    %v799 = vpack.c.b16 %v691, %v689
    %v800 = vpack.c.b16 %v692, %v690
    %v801 = vpack.c.b16 %v695, %v693
    %v802 = vpack.c.b16 %v696, %v694
    %v803 = vpack.c.b16 %v699, %v697
    %v804 = vpack.c.b16 %v700, %v698
    %v805 = vpack.c.b16 %v703, %v701
    %v806 = vpack.c.b16 %v704, %v702
    %v807 = vpack.c.b16 %v707, %v705
    %v808 = vpack.c.b16 %v708, %v706
    %v809 = vpack.c.b16 %v711, %v709
    %v810 = vpack.c.b16 %v712, %v710
    %v811 = vpack.c.b16 %v715, %v713
    %v812 = vpack.c.b16 %v716, %v714
    %v813 = vpack.c.b16 %v719, %v717
    %v814 = vpack.c.b16 %v720, %v718
    %v815 = vpack.c.b16 %v723, %v721
    %v816 = vpack.c.b16 %v724, %v722
    %v817 = vpack.c.b16 %v727, %v725
    %v818 = vpack.c.b16 %v728, %v726
    %v819 = vpack.c.b16 %v731, %v729
    %v820 = vpack.c.b16 %v732, %v730
    %v821 = vpack.c.b16 %v735, %v733
    %v822 = vpack.c.b16 %v736, %v734
    %v823 = vpack.c.b16 %v739, %v737
    %v824 = vpack.c.b16 %v740, %v738
    %v825 = vpack.c.b16 %v743, %v741
    %v826 = vpack.c.b16 %v744, %v742
    %v827 = vpack.c.b16 %v747, %v745
    %v828 = vpack.c.b16 %v748, %v746
    %v829 = vpack.c.b16 %v751, %v749
    %v830 = vpack.c.b16 %v752, %v750
    %v831 = vpack.c.b16 %v755, %v753
    %v832 = vpack.c.b16 %v756, %v754
    %v833 = vpack.c.b16 %v759, %v757
    %v834 = vpack.c.b16 %v760, %v758
    %v835 = vpack.c.b16 %v763, %v761
    %v836 = vpack.c.b16 %v764, %v762
    %v837 = vpack.c.b16 %v767, %v765
    %v838 = vpack.c.b16 %v768, %v766
    %v839 = vpack.c.b16 %v771, %v769
    %v840 = vpack.c.b16 %v772, %v770
    %v841 = vpack.c.b16 %v775, %v773
    %v842 = vpack.c.b16 %v776, %v774
    %v843 = vpack.c.b16 %v779, %v777
    %v844 = vpack.c.b16 %v780, %v778
    %909 = vmatprep.subr.bf16.mxu0 %v796
    %910 = vmatpush1.bf16.msra.mxu0 %v795
    %911 = vmatprep.subr.bf16.mxu0 %v794
    %912 = vmatpush1.bf16.msra.mxu0 %v793
    %913 = vmatprep.subr.bf16.mxu0 %v792
    %914 = vmatpush1.bf16.msra.mxu0 %v791
    %915 = vmatprep.subr.bf16.mxu0 %v790
    %916 = vmatpush1.bf16.msra.mxu0 %v789
    %917 = vmatprep.subr.bf16.mxu0 %v788
    %918 = vmatpush1.bf16.msra.mxu0 %v787
    %919 = vmatprep.subr.bf16.mxu0 %v786
    %920 = vmatpush1.bf16.msra.mxu0 %v785
    %921 = vmatprep.subr.bf16.mxu0 %v784
    %922 = vmatpush1.bf16.msra.mxu0 %v783
    %923 = vmatprep.subr.bf16.mxu0 %v782
    %924 = vmatpush1.bf16.msra.mxu0 %v781
    %925 = vmatprep.subr.bf16.mxu0 %v812
    %926 = vmatpush2.bf16.msra.mxu0 %v811
    %927 = vmatprep.subr.bf16.mxu0 %v810
    %928 = vmatpush2.bf16.msra.mxu0 %v809
    %929 = vmatprep.subr.bf16.mxu0 %v808
    %930 = vmatpush2.bf16.msra.mxu0 %v807
    %931 = vmatprep.subr.bf16.mxu0 %v806
    %932 = vmatpush2.bf16.msra.mxu0 %v805
    %933 = vmatprep.subr.bf16.mxu0 %v804
    %934 = vmatpush2.bf16.msra.mxu0 %v803
    %935 = vmatprep.subr.bf16.mxu0 %v802
    %936 = vmatpush2.bf16.msra.mxu0 %v801
    %937 = vmatprep.subr.bf16.mxu0 %v800
    %938 = vmatpush2.bf16.msra.mxu0 %v799
    %939 = vmatprep.subr.bf16.mxu0 %v798
    %940 = vmatpush2.bf16.msra.mxu0 %v797
    %941 = vmatprep.mubr.bf16.mxu0 %v520
    %942 = vmatmul.mubr.bf16.gmra.mxu0 %v519
    %v943 = vpop.f32.mrf.mxu0
    %v944 = vadd.f32 %v588, %v943
    %v945 = vpop.f32.mrf.mxu0
    %v946 = vadd.f32 %v588, %v945
    %v947 = vpop.f32.mrf.mxu0
    %v948 = vpop.f32.mrf.mxu0
    %949 = vdwg.mxu0
    %950 = vmatprep.subr.bf16.mxu0 %v828
    %951 = vmatpush1.bf16.msra.mxu0 %v827
    %952 = vmatprep.subr.bf16.mxu0 %v826
    %953 = vmatpush1.bf16.msra.mxu0 %v825
    %954 = vmatprep.subr.bf16.mxu0 %v824
    %955 = vmatpush1.bf16.msra.mxu0 %v823
    %956 = vmatprep.subr.bf16.mxu0 %v822
    %957 = vmatpush1.bf16.msra.mxu0 %v821
    %958 = vmatprep.subr.bf16.mxu0 %v820
    %959 = vmatpush1.bf16.msra.mxu0 %v819
    %960 = vmatprep.subr.bf16.mxu0 %v818
    %961 = vmatpush1.bf16.msra.mxu0 %v817
    %962 = vmatprep.subr.bf16.mxu0 %v816
    %963 = vmatpush1.bf16.msra.mxu0 %v815
    %964 = vmatprep.subr.bf16.mxu0 %v814
    %965 = vmatpush1.bf16.msra.mxu0 %v813
    %966 = vmatprep.subr.bf16.mxu0 %v844
    %967 = vmatpush2.bf16.msra.mxu0 %v843
    %968 = vmatprep.subr.bf16.mxu0 %v842
    %969 = vmatpush2.bf16.msra.mxu0 %v841
    %970 = vmatprep.subr.bf16.mxu0 %v840
    %971 = vmatpush2.bf16.msra.mxu0 %v839
    %972 = vmatprep.subr.bf16.mxu0 %v838
    %973 = vmatpush2.bf16.msra.mxu0 %v837
    %974 = vmatprep.subr.bf16.mxu0 %v836
    %975 = vmatpush2.bf16.msra.mxu0 %v835
    %976 = vmatprep.subr.bf16.mxu0 %v834
    %977 = vmatpush2.bf16.msra.mxu0 %v833
    %978 = vmatprep.subr.bf16.mxu0 %v832
    %979 = vmatpush2.bf16.msra.mxu0 %v831
    %980 = vmatprep.subr.bf16.mxu0 %v830
    %981 = vmatpush2.bf16.msra.mxu0 %v829
    %982 = vmatprep.mubr.bf16.mxu0 %v522
    %983 = vmatmul.mubr.bf16.gmra.mxu0 %v521
    %v984 = vpop.f32.mrf.mxu0
    %v985 = vadd.f32 %v944, %v984
    %v986 = vpop.f32.mrf.mxu0
    %v987 = vadd.f32 %v946, %v986
    %v988 = vpop.f32.mrf.mxu0
    %v989 = vpop.f32.mrf.mxu0
    %990 = vdwg.mxu0
    %v991 = vxor.u32 %v985, 2147483648
    %v992 = vxor.u32 %v987, 2147483648
    %v993 = vmul.f32 %v991, 1.442695
    %v994 = vpow.pop %v993
    %v995 = vmul.f32 %v992, 1.442695
    %v996 = vpow.pop %v995
    %v997 = vadd.f32 %v994, 1.0
    %v998 = vadd.f32 %v996, 1.0
    %v999 = vrcp.pop %v997
    %v1000 = vmul.f32 1.0, %v999
    %v1001 = vrcp.pop %v998
    %v1002 = vmul.f32 1.0, %v1001
    %v1005 = vcombine.low %v1000, %v1002
    %v1007 = vunpack.c.l.s4 1966171168
    %v1008 = vunpack.c.0.s8 %v1007
    %v1009 = vlaneseq
    %v1010 = vshrl.u32 %v1009, 7
    %v1011 = vsub.s32 %v1008, %v1010
    %v1012 = vrot.slane %v1005, %v1011
    %v1013 = vcombine.high %v1012, %v1012
    %v1015 = vunpack.c.l.s4 1966171168
    %v1016 = vunpack.c.0.s8 %v1015
    %v1017 = vlaneseq
    %v1018 = vshrl.u32 %v1017, 7
    %v1019 = vsub.s32 %v1016, %v1018
    %v1020 = vrot.slane %v1012, %v1019
    %v1022 = vunpack.c.l.s4 1966171168
    %v1023 = vunpack.c.0.s8 %v1022
    %v1024 = vlaneseq
    %v1025 = vshrl.u32 %v1024, 7
    %v1026 = vsub.s32 %v1023, %v1025
    %v1027 = vrot.slane %v1013, %v1026
    %v1028 = vlaneseq
    %v1029 = vshrl.u32 %v1028, 7
    %v1030 = vsub.s32 0, %v1029
    %v1031 = vrot.slane %v1020, %v1030
    %v1032 = vlaneseq
    %v1033 = vshrl.u32 %v1032, 7
    %v1034 = vsub.s32 1, %v1033
    %v1035 = vrot.slane %v1020, %v1034
    %v1036 = vlaneseq
    %v1037 = vshrl.u32 %v1036, 7
    %v1038 = vsub.s32 0, %v1037
    %v1039 = vrot.slane %v1027, %v1038
    %v1040 = vlaneseq
    %v1041 = vshrl.u32 %v1040, 7
    %v1042 = vsub.s32 1, %v1041
    %v1043 = vrot.slane %v1027, %v1042
    %v1048 = vmul.f32 %v411, %v1031
    %v1049 = vmul.f32 %v412, %v1035
    %v1050 = vmul.f32 %v413, %v1031
    %v1051 = vmul.f32 %v414, %v1035
    %v1052 = vmul.f32 %v415, %v1031
    %v1053 = vmul.f32 %v416, %v1035
    %v1054 = vmul.f32 %v417, %v1031
    %v1055 = vmul.f32 %v418, %v1035
    %v1056 = vmul.f32 %v419, %v1039
    %v1057 = vmul.f32 %v420, %v1043
    %v1058 = vmul.f32 %v421, %v1039
    %v1059 = vmul.f32 %v422, %v1043
    %v1060 = vmul.f32 %v423, %v1039
    %v1061 = vmul.f32 %v424, %v1043
    %v1062 = vmul.f32 %v425, %v1039
    %v1063 = vmul.f32 %v426, %v1043
    %1064 = vst [vmem:[#allocation8] sm:$0xff] %v1048
    %1065 = vst [vmem:[#allocation8 + $0x8] sm:$0xff] %v1049
    %1066 = vst [vmem:[#allocation8 + $0x10] sm:$0xff] %v1050
    %1067 = vst [vmem:[#allocation8 + $0x18] sm:$0xff] %v1051
    %1068 = vst [vmem:[#allocation8 + $0x20] sm:$0xff] %v1052
    %1069 = vst [vmem:[#allocation8 + $0x28] sm:$0xff] %v1053
    %1070 = vst [vmem:[#allocation8 + $0x30] sm:$0xff] %v1054
    %1071 = vst [vmem:[#allocation8 + $0x38] sm:$0xff] %v1055
    %1072 = vst [vmem:[#allocation8 + $0x40] sm:$0xff] %v1056
    %1073 = vst [vmem:[#allocation8 + $0x48] sm:$0xff] %v1057
    %1074 = vst [vmem:[#allocation8 + $0x50] sm:$0xff] %v1058
    %1075 = vst [vmem:[#allocation8 + $0x58] sm:$0xff] %v1059
    %1076 = vst [vmem:[#allocation8 + $0x60] sm:$0xff] %v1060
    %1077 = vst [vmem:[#allocation8 + $0x68] sm:$0xff] %v1061
    %1078 = vst [vmem:[#allocation8 + $0x70] sm:$0xff] %v1062
    %1079 = vst [vmem:[#allocation8 + $0x78] sm:$0xff] %v1063
    // Predicated region
    $region38: #{tpu_custom_call.1} parent=1 // pred_check
      _
    $region39: #{tpu_custom_call.1} parent=1 // pred_check_branch
      %1081 = sbr.rel (0) target = $region41
    $region40: #{tpu_custom_call.1} parent=1 // pred_region
      %s1083 = ssub.s32 2048, 2048
      %1084 = vsyncadd [#allocation5], %s1083
      %s1085 = sshll.u32 [#allocation8], 4
      %s1086 = int_to_ptr.vmem [resolvable:$true] %s1085
      %1091 = dma.vmem_to_hbm [thread:$0]  %s1086, 2048, %s7, [#allocation5], 256, 256, 16
    $region41: #{tpu_custom_call.1} parent=1 // pred_fallthru
      _
    // Predicated region
    $region42: #{tpu_custom_call.1} parent=1 // pred_check
      _
    $region43: #{tpu_custom_call.1} parent=1 // pred_check_branch
      %1093 = sbr.rel (0) target = $region45
    $region44: #{tpu_custom_call.1} parent=1 // pred_region
      %1094 = dma.done [#allocation5], 2048
    $region45: #{tpu_custom_call.1} parent=1 // pred_fallthru
      _
    %1095 = vsyncpa [#allocation4], 1
    %1096 = vsyncpa [#allocation7], 1
    %1097 = vsyncpa [#allocation5], 1

</llo_original>
